<compile_context>
chip_gen: v7x
topology: tpu7x:2x2x1
jax: 0.10.0
libtpu: 0.0.40
codegen_flags: <defaults>
</compile_context>

<pallas_src>
import math

import jax
import jax.numpy as jnp
import numpy as np
from jax.experimental import pallas as pl
from jax.experimental.pallas import tpu as pltpu

LANE = 128


# ---------------------------------------------------------------------------
# DCT weight construction (deterministic, mirrors get_dct_weights)
# ---------------------------------------------------------------------------
def get_1d_dct(i, freq, L):
    result = math.cos(math.pi * freq * (i + 0.5) / L) / math.sqrt(L)
    return result * (1 if freq == 0 else math.sqrt(2))


def get_dct_weights(width, channel, fidx_u, fidx_v):
    dct_weights = np.zeros((1, channel, width, width), dtype=np.float32)
    c_part = channel // len(fidx_u)
    for i, (u_x, v_y) in enumerate(zip(fidx_u, fidx_v)):
        for x in range(width):
            for y in range(width):
                coor_value = get_1d_dct(x, u_x, width) * get_1d_dct(y, v_y, width)
                dct_weights[:, i * c_part:(i + 1) * c_part, x, y] = coor_value
    return dct_weights


# ---------------------------------------------------------------------------
# Parameter preparation (hoisted out of the per-call wrapper; cache the result)
# ---------------------------------------------------------------------------
def prepare_fcanet_params(dct_weights, w1, b1, w2, b2):
    """Pack / lane-pad the (tiny) weights once.  Returns a dict of device arrays."""
    dct = jnp.asarray(dct_weights, jnp.float32)
    if dct.ndim == 4:
        assert dct.shape[0] == 1, "expected leading singleton dim on dct_weights"
        dct = dct[0]
    C_in, H, W = dct.shape
    C_mid = w1.shape[1]
    C_out = w2.shape[1]

    mid_p = LANE * pl.cdiv(C_mid, LANE)
    out_p = LANE * pl.cdiv(C_out, LANE)

    # ~16 KiB resident dct tile (f32); tiny lane-padded dense weights / biases.
    dct2 = dct.reshape(C_in, H * W)
    w1p = jnp.pad(w1.astype(jnp.float32), ((0, 0), (0, mid_p - C_mid)))
    b1p = jnp.pad(b1.reshape(1, C_mid).astype(jnp.float32),
                  ((0, 0), (0, mid_p - C_mid)))
    w2p = jnp.pad(w2.astype(jnp.float32),
                  ((0, mid_p - C_mid), (0, out_p - C_out)))
    b2p = jnp.pad(b2.reshape(1, C_out).astype(jnp.float32),
                  ((0, 0), (0, out_p - C_out)))

    return dict(dct=dct2, w1p=w1p, b1p=b1p, w2p=w2p, b2p=b2p,
                C_in=C_in, H=H, W=W, C_mid=C_mid, C_out=C_out,
                mid_p=mid_p, out_p=out_p)


# ---------------------------------------------------------------------------
# Pallas kernel: fused DCT-pool -> dense -> LeakyReLU -> dense -> sigmoid
# ---------------------------------------------------------------------------
def fcanet_kernel(x_ref, dct_ref, w1_ref, b1_ref, w2_ref, b2_ref, o_ref):
    # x_ref  : (block_b, C_in, HW)  producer dtype (f32 or bf16), streamed over batch
    # dct_ref: (C_in, HW)           f32, resident
    # w1_ref : (C_in, mid_p)        f32, resident
    # b1_ref : (1, mid_p)           f32
    # w2_ref : (mid_p, out_p)       f32, resident
    # b2_ref : (1, out_p)           f32
    # o_ref  : (block_b, out_p)     f32
    x = x_ref[...].astype(jnp.float32)                 # in-kernel upcast (bf16 stream ok)
    pooled = jnp.sum(x * dct_ref[...], axis=-1)        # (block_b, C_in): VPU mul + XLU reduce
    h = jnp.dot(pooled, w1_ref[...],
                preferred_element_type=jnp.float32) + b1_ref[...]
    h = jnp.maximum(h, 0.1 * h)                        # LeakyReLU(0.1), 2 VALU ops
    y = jnp.dot(h, w2_ref[...],
                preferred_element_type=jnp.float32) + b2_ref[...]
    # sigmoid: exp on EUP, approx reciprocal stays on the (otherwise idle) EUP slot
    o_ref[...] = pl.reciprocal(1.0 + jnp.exp(-y), approx=True)


def _pick_block_b(B):
    """Largest multiple-of-8 divisor of B (<=128) that still gives >=2 grid steps."""
    for cand in (128, 64, 32, 16, 8):
        if B % cand == 0 and B // cand >= 2:
            return cand
    return B  # tiny batch: single grid step


def fcanet_forward(x, params, *, block_b=None):
    """x: (B, C_in, H, W) NCHW, f32 or bf16 (producer dtype is streamed as-is).
    Returns (B, C_out, 1, 1) float32."""
    B, C_in, H, W = x.shape
    assert (C_in, H, W) == (params["C_in"], params["H"], params["W"])
    HW = H * W
    mid_p, out_p, C_out = params["mid_p"], params["out_p"], params["C_out"]

    if block_b is None:
        block_b = _pick_block_b(B)
    assert B % block_b == 0, "block_b must divide B"

    # Metadata-only reshape of contiguous dims; no wrapper-side cast / pad of x.
    x3 = x.reshape(B, C_in, HW)

    # VMEM budget: double-buffered x + output tiles, double-buffered (tiny) residents,
    # plus headroom for compiler scratch.  Capped well below v7x's 64 MiB.
    itemsize = jnp.dtype(x.dtype).itemsize
    resident_bytes = 4 * (C_in * HW + C_in * mid_p + mid_p + mid_p * out_p + out_p)
    footprint = (2 * block_b * C_in * HW * itemsize
                 + 2 * block_b * out_p * 4
                 + 2 * resident_bytes)
    vmem_limit = int(min(48 * 1024 * 1024, max(16 * 1024 * 1024,
                                               footprint + 4 * 1024 * 1024)))

    grid = (B // block_b,)
    out = pl.pallas_call(
        fcanet_kernel,
        out_shape=jax.ShapeDtypeStruct((B, out_p), jnp.float32),
        grid=grid,
        in_specs=[
            pl.BlockSpec((block_b, C_in, HW), lambda i: (i, 0, 0)),  # x stream (pipelined)
            pl.BlockSpec((C_in, HW), lambda i: (0, 0)),              # dct (resident)
            pl.BlockSpec((C_in, mid_p), lambda i: (0, 0)),           # w1 (resident)
            pl.BlockSpec((1, mid_p), lambda i: (0, 0)),              # b1
            pl.BlockSpec((mid_p, out_p), lambda i: (0, 0)),          # w2 (resident)
            pl.BlockSpec((1, out_p), lambda i: (0, 0)),              # b2
        ],
        out_specs=pl.BlockSpec((block_b, out_p), lambda i: (i, 0)),  # lane-dense store
        compiler_params=pltpu.CompilerParams(
            dimension_semantics=("parallel",),   # >=2 steps -> megacore shard on v7x
            vmem_limit_bytes=vmem_limit,
        ),
    )(x3, params["dct"], params["w1p"], params["b1p"], params["w2p"], params["b2p"])

    return out[:, :C_out].reshape(B, C_out, 1, 1)


# ---------------------------------------------------------------------------
# Pure-JAX reference for verification
# ---------------------------------------------------------------------------
def fcanet_ref(x, dct_weights, w1, b1, w2, b2):
    pooled = jnp.sum(x * dct_weights, axis=(2, 3))               # (B, C_in)
    h = pooled @ w1 + b1
    h = jnp.where(h >= 0, h, 0.1 * h)
    y = h @ w2 + b2
    y = jax.nn.sigmoid(y)
    return y[:, :, None, None]


if __name__ == "__main__":
    # Module config (chan_in must be divisible by the 16 freq pairs used by the DCT)
    B = 16
    chan_in = 16
    chan_out = 32
    reduction = 4
    width = 16
    chan_mid = max(3, chan_out // reduction)  # 8

    # DCT buffer (deterministic)
    freq_w, freq_h = [0] * 8, list(range(8))
    dct_np = get_dct_weights(width, chan_in, [*freq_w, *freq_h], [*freq_h, *freq_w])
    dct_weights = jnp.asarray(dct_np)                            # (1, C_in, W, W)

    # Deterministic parameter init (1x1 convs == dense layers)
    key = jax.random.PRNGKey(0)
    k_x, k_w1, k_b1, k_w2, k_b2 = jax.random.split(key, 5)

    w1 = jax.random.normal(k_w1, (chan_in, chan_mid), jnp.float32) / math.sqrt(chan_in)
    b1 = jax.random.normal(k_b1, (1, chan_mid), jnp.float32) * 0.01
    w2 = jax.random.normal(k_w2, (chan_mid, chan_out), jnp.float32) / math.sqrt(chan_mid)
    b2 = jax.random.normal(k_b2, (1, chan_out), jnp.float32) * 0.01

    x = jax.random.normal(k_x, (B, chan_in, width, width), jnp.float32)

    # Hoisted once (inference-style); reused across calls.
    params = prepare_fcanet_params(dct_weights, w1, b1, w2, b2)

    ref = fcanet_ref(x, dct_weights[0], w1, b1, w2, b2)

    # f32 x stream (grid = (2,) -> pipelined + megacore-splittable).
    out_f32 = jax.block_until_ready(fcanet_forward(x, params))
    assert out_f32.shape == (B, chan_out, 1, 1)
    # approx=True reciprocal => allow small sigmoid tolerance
    np.testing.assert_allclose(np.asarray(out_f32), np.asarray(ref),
                               rtol=5e-3, atol=5e-3)

    # Producer-supplied bf16 x (no wrapper-side cast): halves the x HBM stream on
    # v5e / v6e / v7x alike; weights / accumulation stay f32 in-kernel.
    x_bf16 = x.astype(jnp.bfloat16)
    out_bf16 = jax.block_until_ready(fcanet_forward(x_bf16, params))
    assert np.all(np.isfinite(np.asarray(out_bf16)))
    np.testing.assert_allclose(np.asarray(out_bf16), np.asarray(ref), atol=5e-2)

    print("KERNEL_OK")
</pallas_src>

<mosaic_0001>
module attributes {stable_mosaic.version = 11 : i64} {
  func.func @fcanet_kernel(%arg0: i32, %arg1: memref<8x16x256xf32, #tpu.memory_space<vmem>>, %arg2: memref<16x256xf32, #tpu.memory_space<vmem>>, %arg3: memref<16x128xf32, #tpu.memory_space<vmem>>, %arg4: memref<1x128xf32, #tpu.memory_space<vmem>>, %arg5: memref<128x128xf32, #tpu.memory_space<vmem>>, %arg6: memref<1x128xf32, #tpu.memory_space<vmem>>, %arg7: memref<8x128xf32, #tpu.memory_space<vmem>>) attributes {dimension_semantics = [#tpu.dimension_semantics<parallel>], iteration_bounds = array<i64: 2>, scalar_prefetch = 0 : i64, scratch_operands = 0 : i64, tpu.core_type = #tpu.core_type<tc>, window_params = [{transform_indices = @transform_0, window_bounds = array<i64: 8, 16, 256>}, {pipeline_mode = #tpu.pipeline_mode<synchronous>, transform_indices = @transform_1, window_bounds = array<i64: 16, 256>}, {pipeline_mode = #tpu.pipeline_mode<synchronous>, transform_indices = @transform_2, window_bounds = array<i64: 16, 128>}, {pipeline_mode = #tpu.pipeline_mode<synchronous>, transform_indices = @transform_3, window_bounds = array<i64: 1, 128>}, {pipeline_mode = #tpu.pipeline_mode<synchronous>, transform_indices = @transform_4, window_bounds = array<i64: 128, 128>}, {pipeline_mode = #tpu.pipeline_mode<synchronous>, transform_indices = @transform_5, window_bounds = array<i64: 1, 128>}, {transform_indices = @transform_6, window_bounds = array<i64: 8, 128>}]} {
    %c0 = arith.constant 0 : index
    %c0_0 = arith.constant 0 : index
    %c0_1 = arith.constant 0 : index
    %0 = vector.load %arg1[%c0, %c0_0, %c0_1] : memref<8x16x256xf32, #tpu.memory_space<vmem>>, vector<8x16x256xf32>
    %c0_2 = arith.constant 0 : index
    %c0_3 = arith.constant 0 : index
    %1 = vector.load %arg2[%c0_2, %c0_3] : memref<16x256xf32, #tpu.memory_space<vmem>>, vector<16x256xf32>
    %2 = vector.shape_cast %1 : vector<16x256xf32> to vector<1x16x256xf32>
    %3 = vector.broadcast %2 : vector<1x16x256xf32> to vector<8x16x256xf32>
    %4 = arith.mulf %0, %3 : vector<8x16x256xf32>
    %cst = arith.constant dense<0.000000e+00> : vector<8x16xf32>
    %5 = vector.multi_reduction <add>, %4, %cst [2] : vector<8x16x256xf32> to vector<8x16xf32>
    %c0_4 = arith.constant 0 : index
    %c0_5 = arith.constant 0 : index
    %6 = vector.load %arg3[%c0_4, %c0_5] : memref<16x128xf32, #tpu.memory_space<vmem>>, vector<16x128xf32>
    %cst_6 = arith.constant dense<0.000000e+00> : vector<8x128xf32>
    %7 = tpu.matmul %5, %6, %cst_6 {dimension_numbers = #tpu.dot_dimension_numbers<[1], [0], [0], [1], [0, 0, 1, 1], [], []>} : vector<8x16xf32>, vector<16x128xf32>, vector<8x128xf32> -> vector<8x128xf32>
    %c0_7 = arith.constant 0 : index
    %c0_8 = arith.constant 0 : index
    %8 = vector.load %arg4[%c0_7, %c0_8] : memref<1x128xf32, #tpu.memory_space<vmem>>, vector<1x128xf32>
    %9 = vector.broadcast %8 : vector<1x128xf32> to vector<8x128xf32>
    %10 = arith.addf %7, %9 : vector<8x128xf32>
    %cst_9 = arith.constant 1.000000e-01 : f32
    %11 = vector.broadcast %cst_9 : f32 to vector<8x128xf32>
    %12 = arith.mulf %11, %10 : vector<8x128xf32>
    %13 = arith.maximumf %10, %12 : vector<8x128xf32>
    %c0_10 = arith.constant 0 : index
    %c0_11 = arith.constant 0 : index
    %14 = vector.load %arg5[%c0_10, %c0_11] : memref<128x128xf32, #tpu.memory_space<vmem>>, vector<128x128xf32>
    %cst_12 = arith.constant dense<0.000000e+00> : vector<8x128xf32>
    %15 = tpu.matmul %13, %14, %cst_12 {dimension_numbers = #tpu.dot_dimension_numbers<[1], [0], [0], [1], [0, 0, 1, 1], [], []>} : vector<8x128xf32>, vector<128x128xf32>, vector<8x128xf32> -> vector<8x128xf32>
    %c0_13 = arith.constant 0 : index
    %c0_14 = arith.constant 0 : index
    %16 = vector.load %arg6[%c0_13, %c0_14] : memref<1x128xf32, #tpu.memory_space<vmem>>, vector<1x128xf32>
    %17 = vector.broadcast %16 : vector<1x128xf32> to vector<8x128xf32>
    %18 = arith.addf %15, %17 : vector<8x128xf32>
    %cst_15 = arith.constant 0.000000e+00 : f32
    %19 = vector.broadcast %cst_15 : f32 to vector<8x128xf32>
    %20 = arith.subf %19, %18 : vector<8x128xf32>
    %21 = math.exp %20 : vector<8x128xf32>
    %cst_16 = arith.constant 1.000000e+00 : f32
    %22 = vector.broadcast %cst_16 : f32 to vector<8x128xf32>
    %23 = arith.addf %22, %21 : vector<8x128xf32>
    %24 = tpu.reciprocal %23 {approx = true} : vector<8x128xf32> -> vector<8x128xf32>
    %c0_17 = arith.constant 0 : index
    %c0_18 = arith.constant 0 : index
    %25 = vector.load %arg7[%c0_17, %c0_18] : memref<8x128xf32, #tpu.memory_space<vmem>>, vector<8x128xf32>
    tpu.vector_store %arg7[%c0_17, %c0_18], %24 {strides = array<i32>} : memref<8x128xf32, #tpu.memory_space<vmem>>, vector<8x128xf32>,
    return
  }
  func.func @transform_0(%arg0: i32) -> (i32, i32, i32) {
    %c0_i32 = arith.constant 0 : i32
    %c0_i32_0 = arith.constant 0 : i32
    %c0_i32_1 = arith.constant 0 : i32
    return %arg0, %c0_i32, %c0_i32_0 : i32, i32, i32
  }
  func.func @transform_1(%arg0: i32) -> (i32, i32) {
    %c0_i32 = arith.constant 0 : i32
    %c0_i32_0 = arith.constant 0 : i32
    %c0_i32_1 = arith.constant 0 : i32
    return %c0_i32, %c0_i32_0 : i32, i32
  }
  func.func @transform_2(%arg0: i32) -> (i32, i32) {
    %c0_i32 = arith.constant 0 : i32
    %c0_i32_0 = arith.constant 0 : i32
    %c0_i32_1 = arith.constant 0 : i32
    return %c0_i32, %c0_i32_0 : i32, i32
  }
  func.func @transform_3(%arg0: i32) -> (i32, i32) {
    %c0_i32 = arith.constant 0 : i32
    %c0_i32_0 = arith.constant 0 : i32
    %c0_i32_1 = arith.constant 0 : i32
    return %c0_i32, %c0_i32_0 : i32, i32
  }
  func.func @transform_4(%arg0: i32) -> (i32, i32) {
    %c0_i32 = arith.constant 0 : i32
    %c0_i32_0 = arith.constant 0 : i32
    %c0_i32_1 = arith.constant 0 : i32
    return %c0_i32, %c0_i32_0 : i32, i32
  }
  func.func @transform_5(%arg0: i32) -> (i32, i32) {
    %c0_i32 = arith.constant 0 : i32
    %c0_i32_0 = arith.constant 0 : i32
    %c0_i32_1 = arith.constant 0 : i32
    return %c0_i32, %c0_i32_0 : i32, i32
  }
  func.func @transform_6(%arg0: i32) -> (i32, i32) {
    %c0_i32 = arith.constant 0 : i32
    %c0_i32_0 = arith.constant 0 : i32
    return %arg0, %c0_i32 : i32, i32
  }
}

</mosaic_0001>

<llo_original>
// kernel: tpu_custom_call.1
$region0: #{tpu_custom_call.1}
  #allocation0 [shape = 'u32[]', space=smem, size = 0x4, offset = 0x4, fixed_abs, tag = 'smem constant byte address 0x4 - core index']
  #allocation1 [shape = 'u32[144,128]{1,0:T(1,128)}', space=vmem, size = 0x12000, scoped, tag = 'internal scratch']
  %s0 = inlined_call_operand.hbm [shape: f32[16,16,256], index: 0, kind: input, shape index: {}]
  %s1 = inlined_call_operand.hbm [shape: f32[16,256], index: 1, kind: input, shape index: {}]
  %s2 = inlined_call_operand.hbm [shape: f32[16,128], index: 2, kind: input, shape index: {}]
  %s3 = inlined_call_operand.vmem [shape: f32[1,128], index: 3, kind: input, shape index: {}]
  %s4 = inlined_call_operand.hbm [shape: f32[128,128], index: 4, kind: input, shape index: {}]
  %s5 = inlined_call_operand.vmem [shape: f32[1,128], index: 5, kind: input, shape index: {}]
  %s6 = inlined_call_operand.hbm [shape: f32[16,128], index: 6, kind: output, shape index: {}]
  %s7 = sld [smem:[#allocation0]]
  $region73: #{tpu_custom_call.1} parent=0
    _
  %s9 = ssub.s32 1, %s7
  %s10 = scalar_select 0, %s9, %s7
  $region1: #{tpu_custom_call.1} parent=0
    #allocation2 [shape = 'u8[262144]{0}', space=vmem, size = 0x40000, scoped, tag = 'input window, operand 0']
    #allocation3 [shape = 's32[2]{0}', space=sflag, size = 0x8, scoped, tag = 'scoped memory for tpu_custom_call.1']
    #allocation4 [shape = 's32[2]{0}', space=sflag, size = 0x8, scoped, tag = 'scoped memory for tpu_custom_call.1']
    #allocation5 [shape = 'u8[16384]{0}', space=vmem, size = 0x4000, scoped, tag = 'input window, operand 1, single buffered']
    #allocation6 [shape = 's32[1]{0}', space=sflag, size = 0x4, scoped, tag = 'scoped memory for tpu_custom_call.1']
    #allocation7 [shape = 'u8[8192]{0}', space=vmem, size = 0x2000, scoped, tag = 'input window, operand 2, single buffered']
    #allocation8 [shape = 'u8[65536]{0}', space=vmem, size = 0x10000, scoped, tag = 'input window, operand 4, single buffered']
    #allocation9 [shape = 's32[1]{0}', space=sflag, size = 0x4, scoped, tag = 'scoped memory for tpu_custom_call.1']
    #allocation10 [shape = 'u8[8192]{0}', space=vmem, size = 0x2000, scoped, tag = 'output window, operand 0']
    %11 = vsyncpa [#allocation3], 0
    %s12 = scalar_lea.sflag [#allocation3], 1
    %13 = vsyncpa %s12, 0
    %14 = vsyncpa [#allocation6], 0
    %15 = vsyncpa [#allocation9], 0
    %16 = vsyncpa [#allocation4], 0
    %s17 = scalar_lea.sflag [#allocation4], 1
    %18 = vsyncpa %s17, 0
    loop: start=0, step=1, limit=4
    $region2: #{tpu_custom_call.1} parent=1 // loop_pre_header
      _
    $region3: #{tpu_custom_call.1} parent=1 // loop_header
      %s20 = sphi 0, %s24
      %p21 = scmp.ge.s32.totalorder %s20, 4
      %s30 = sphi 0, %s32
      %s33 = sphi 0, %s30
      %s34 = sphi 0, %s33
      %s50 = sphi 0, %s34
      %s54 = sphi 0, %s54
      %s56 = sphi 0, %s54
      %s57 = sphi 0, %s56
      %s71 = sphi 0, %s57
      %s75 = sphi 0, %s75
      %s77 = sphi 0, %s75
      %s78 = sphi 0, %s77
      %s92 = sphi 0, %s78
      %s96 = sphi 0, %s96
      %s98 = sphi 0, %s96
      %s99 = sphi 0, %s98
      %s113 = sphi 0, %s99
      %s117 = sphi 0, %s117
      %s119 = sphi 0, %s117
      %s120 = sphi 0, %s119
      %s134 = sphi 0, %s120
      %s138 = sphi 0, %s138
      %s140 = sphi 0, %s138
      %s141 = sphi 0, %s140
      %s155 = sphi 0, %s141
      %s161 = sphi 0, %s163
      %s164 = sphi 0, %s161
      %s165 = sphi 0, %s164
      %s181 = sphi 0, %s165
    $region4: #{tpu_custom_call.1} parent=1 // loop_header_branch
      %23 = sbr.rel (%p21) target = $region8
    $region5: #{tpu_custom_call.1} parent=1 // loop_body
      %s25 = ssub.s32 %s20, 1
      %s26 = ssub.s32 %s20, 2
      %s27 = sadd.s32 %s20, 1
      %s28 = ssub.s32 %s20, %s27
      %p29 = scmp.eq.s32.totalorder %s28, 0
      %s31 = sadd.s32 %s30, 1
      %s32 = scalar_select %p29, %s30, %s31
      %p35 = pneg %p29
      %p36 = scmp.eq.s32.totalorder %s20, 1
      %p37 = por %p35, %p36
      %p38 = scmp.ne.s32.totalorder %s30, %s33
      %p39 = scmp.eq.s32.totalorder %s20, 0
      %p40 = por %p38, %p39
      %p41 = scmp.ne.s32.totalorder %s30, %s33
      %p42 = scmp.eq.s32.totalorder %s25, 1
      %p43 = por %p41, %p42
      %p44 = scmp.ne.s32.totalorder %s33, %s34
      %p45 = scmp.eq.s32.totalorder %s25, 0
      %p46 = por %p44, %p45
      %p47 = scmp.ne.s32.totalorder %s33, %s34
      %p48 = scmp.eq.s32.totalorder %s26, 1
      %p49 = por %p47, %p48
      %p51 = scmp.ne.s32.totalorder %s34, %s50
      %p52 = scmp.eq.s32.totalorder %s26, 0
      %p53 = por %p51, %p52
      %s55 = sadd.s32 %s54, 1
      %p58 = scmp.eq.s32.totalorder %s20, 1
      %p59 = scmp.ne.s32.totalorder %s54, %s56
      %p60 = scmp.eq.s32.totalorder %s20, 0
      %p61 = por %p59, %p60
      %p62 = scmp.ne.s32.totalorder %s54, %s56
      %p63 = scmp.eq.s32.totalorder %s25, 1
      %p64 = por %p62, %p63
      %p65 = scmp.ne.s32.totalorder %s56, %s57
      %p66 = scmp.eq.s32.totalorder %s25, 0
      %p67 = por %p65, %p66
      %p68 = scmp.ne.s32.totalorder %s56, %s57
      %p69 = scmp.eq.s32.totalorder %s26, 1
      %p70 = por %p68, %p69
      %p72 = scmp.ne.s32.totalorder %s57, %s71
      %p73 = scmp.eq.s32.totalorder %s26, 0
      %p74 = por %p72, %p73
      %s76 = sadd.s32 %s75, 1
      %p79 = scmp.eq.s32.totalorder %s20, 1
      %p80 = scmp.ne.s32.totalorder %s75, %s77
      %p81 = scmp.eq.s32.totalorder %s20, 0
      %p82 = por %p80, %p81
      %p83 = scmp.ne.s32.totalorder %s75, %s77
      %p84 = scmp.eq.s32.totalorder %s25, 1
      %p85 = por %p83, %p84
      %p86 = scmp.ne.s32.totalorder %s77, %s78
      %p87 = scmp.eq.s32.totalorder %s25, 0
      %p88 = por %p86, %p87
      %p89 = scmp.ne.s32.totalorder %s77, %s78
      %p90 = scmp.eq.s32.totalorder %s26, 1
      %p91 = por %p89, %p90
      %p93 = scmp.ne.s32.totalorder %s78, %s92
      %p94 = scmp.eq.s32.totalorder %s26, 0
      %p95 = por %p93, %p94
      %s97 = sadd.s32 %s96, 1
      %p100 = scmp.eq.s32.totalorder %s20, 1
      %p101 = scmp.ne.s32.totalorder %s96, %s98
      %p102 = scmp.eq.s32.totalorder %s20, 0
      %p103 = por %p101, %p102
      %p104 = scmp.ne.s32.totalorder %s96, %s98
      %p105 = scmp.eq.s32.totalorder %s25, 1
      %p106 = por %p104, %p105
      %p107 = scmp.ne.s32.totalorder %s98, %s99
      %p108 = scmp.eq.s32.totalorder %s25, 0
      %p109 = por %p107, %p108
      %p110 = scmp.ne.s32.totalorder %s98, %s99
      %p111 = scmp.eq.s32.totalorder %s26, 1
      %p112 = por %p110, %p111
      %p114 = scmp.ne.s32.totalorder %s99, %s113
      %p115 = scmp.eq.s32.totalorder %s26, 0
      %p116 = por %p114, %p115
      %s118 = sadd.s32 %s117, 1
      %p121 = scmp.eq.s32.totalorder %s20, 1
      %p122 = scmp.ne.s32.totalorder %s117, %s119
      %p123 = scmp.eq.s32.totalorder %s20, 0
      %p124 = por %p122, %p123
      %p125 = scmp.ne.s32.totalorder %s117, %s119
      %p126 = scmp.eq.s32.totalorder %s25, 1
      %p127 = por %p125, %p126
      %p128 = scmp.ne.s32.totalorder %s119, %s120
      %p129 = scmp.eq.s32.totalorder %s25, 0
      %p130 = por %p128, %p129
      %p131 = scmp.ne.s32.totalorder %s119, %s120
      %p132 = scmp.eq.s32.totalorder %s26, 1
      %p133 = por %p131, %p132
      %p135 = scmp.ne.s32.totalorder %s120, %s134
      %p136 = scmp.eq.s32.totalorder %s26, 0
      %p137 = por %p135, %p136
      %s139 = sadd.s32 %s138, 1
      %p142 = scmp.eq.s32.totalorder %s20, 1
      %p143 = scmp.ne.s32.totalorder %s138, %s140
      %p144 = scmp.eq.s32.totalorder %s20, 0
      %p145 = por %p143, %p144
      %p146 = scmp.ne.s32.totalorder %s138, %s140
      %p147 = scmp.eq.s32.totalorder %s25, 1
      %p148 = por %p146, %p147
      %p149 = scmp.ne.s32.totalorder %s140, %s141
      %p150 = scmp.eq.s32.totalorder %s25, 0
      %p151 = por %p149, %p150
      %p152 = scmp.ne.s32.totalorder %s140, %s141
      %p153 = scmp.eq.s32.totalorder %s26, 1
      %p154 = por %p152, %p153
      %p156 = scmp.ne.s32.totalorder %s141, %s155
      %p157 = scmp.eq.s32.totalorder %s26, 0
      %p158 = por %p156, %p157
      %s159 = ssub.s32 %s20, %s27
      %p160 = scmp.eq.s32.totalorder %s159, 0
      %s162 = sadd.s32 %s161, 1
      %s163 = scalar_select %p160, %s161, %s162
      %p166 = pneg %p160
      %p167 = scmp.eq.s32.totalorder %s20, 1
      %p168 = por %p166, %p167
      %p169 = scmp.ne.s32.totalorder %s161, %s164
      %p170 = scmp.eq.s32.totalorder %s20, 0
      %p171 = por %p169, %p170
      %p172 = scmp.ne.s32.totalorder %s161, %s164
      %p173 = scmp.eq.s32.totalorder %s25, 1
      %p174 = por %p172, %p173
      %p175 = scmp.ne.s32.totalorder %s164, %s165
      %p176 = scmp.eq.s32.totalorder %s25, 0
      %p177 = por %p175, %p176
      %p178 = scmp.ne.s32.totalorder %s164, %s165
      %p179 = scmp.eq.s32.totalorder %s26, 1
      %p180 = por %p178, %p179
      %p182 = scmp.ne.s32.totalorder %s165, %s181
      %p183 = scmp.eq.s32.totalorder %s26, 0
      %p184 = por %p182, %p183
      %p185 = scmp.le.s32.totalorder 1, %s20
      %p186 = scmp.lt.s32.totalorder %s20, 3
      %p187 = pnand %p185, %p186
      %p188 = pneg %p187
      // Predicated region
      $region9: #{tpu_custom_call.1} parent=5 // pred_check
        _
      $region10: #{tpu_custom_call.1} parent=5 // pred_check_branch
        %190 = sbr.rel (%p187) target = $region12
      $region11: #{tpu_custom_call.1} parent=5 // pred_region
        %s191 = ssub.s32 %s20, 1
        // Predicated region
        $region13: #{tpu_custom_call.1} parent=11 // pred_check
          %p192 = pneg %p67
        $region14: #{tpu_custom_call.1} parent=11 // pred_check_branch
          %194 = sbr.rel (%p192) target = $region16
        $region15: #{tpu_custom_call.1} parent=11 // pred_region
          %s196 = ssub.s32 512, 512
          %197 = vsyncadd [#allocation6], %s196
          %s198 = sshll.u32 [#allocation5], 4
          %s199 = int_to_ptr.vmem [resolvable:$true] %s198
          %204 = dma.hbm_to_vmem [thread:$0]  %s1, 512, %s199, [#allocation6], 256, 256, 16
        $region16: #{tpu_custom_call.1} parent=11 // pred_fallthru
          _
        // Predicated region
        $region17: #{tpu_custom_call.1} parent=11 // pred_check
          %p205 = pneg %p88
        $region18: #{tpu_custom_call.1} parent=11 // pred_check_branch
          %207 = sbr.rel (%p205) target = $region20
        $region19: #{tpu_custom_call.1} parent=11 // pred_region
          %s209 = ssub.s32 256, 256
          %210 = vsyncadd [#allocation6], %s209
          %s211 = sshll.u32 [#allocation7], 4
          %s212 = int_to_ptr.vmem [resolvable:$true] %s211
          %217 = dma.hbm_to_vmem [thread:$0]  %s2, 256, %s212, [#allocation6], 128, 128, 8
        $region20: #{tpu_custom_call.1} parent=11 // pred_fallthru
          _
        // Predicated region
        $region21: #{tpu_custom_call.1} parent=11 // pred_check
          %p218 = pneg %p109
        $region22: #{tpu_custom_call.1} parent=11 // pred_check_branch
          %220 = sbr.rel (%p218) target = $region24
        $region23: #{tpu_custom_call.1} parent=11 // pred_region
          _
        $region24: #{tpu_custom_call.1} parent=11 // pred_fallthru
          _
        // Predicated region
        $region25: #{tpu_custom_call.1} parent=11 // pred_check
          %p221 = pneg %p130
        $region26: #{tpu_custom_call.1} parent=11 // pred_check_branch
          %223 = sbr.rel (%p221) target = $region28
        $region27: #{tpu_custom_call.1} parent=11 // pred_region
          %s225 = ssub.s32 2048, 2048
          %226 = vsyncadd [#allocation9], %s225
          %s227 = sshll.u32 [#allocation8], 4
          %s228 = int_to_ptr.vmem [resolvable:$true] %s227
          %233 = dma.hbm_to_vmem [thread:$0]  %s4, 2048, %s228, [#allocation9], 128, 128, 8
        $region28: #{tpu_custom_call.1} parent=11 // pred_fallthru
          _
        // Predicated region
        $region29: #{tpu_custom_call.1} parent=11 // pred_check
          %p234 = pneg %p151
        $region30: #{tpu_custom_call.1} parent=11 // pred_check_branch
          %236 = sbr.rel (%p234) target = $region32
        $region31: #{tpu_custom_call.1} parent=11 // pred_region
          _
        $region32: #{tpu_custom_call.1} parent=11 // pred_fallthru
          _
      $region12: #{tpu_custom_call.1} parent=5 // pred_fallthru
        _
      %p237 = scmp.lt.s32.totalorder %s20, 2
      // Predicated region
      $region33: #{tpu_custom_call.1} parent=5 // pred_check
        %p238 = pneg %p237
      $region34: #{tpu_custom_call.1} parent=5 // pred_check_branch
        %240 = sbr.rel (%p238) target = $region36
      $region35: #{tpu_custom_call.1} parent=5 // pred_region
        // Predicated region
        $region37: #{tpu_custom_call.1} parent=35 // pred_check
          %p241 = pneg %p40
        $region38: #{tpu_custom_call.1} parent=35 // pred_check_branch
          %243 = sbr.rel (%p241) target = $region40
        $region39: #{tpu_custom_call.1} parent=35 // pred_region
          %s244 = sand.u32 %s30, 1
          %s245 = scalar_lea.sflag [#allocation3], %s244
          %s246 = sand.u32 %s30, 1
          %s247 = smul.addr %s246, 256
          %s248 = scalar_lea.vmem [#allocation2], %s247
          %s249 = smul.u32 8, %s20
          %s251 = ssub.s32 4096, 4096
          %252 = vsyncadd %s245, %s251
          %s253 = smul.addr %s249, 4
          %s254 = smul.addr %s253, 128
          %s255 = scalar_lea.hbm %s0, %s254
          %s256 = sshll.u32 %s248, 4
          %s257 = int_to_ptr.vmem [resolvable:$true] %s256
          %262 = dma.hbm_to_vmem [thread:$0]  %s255, 4096, %s257, %s245, 256, 256, 16
        $region40: #{tpu_custom_call.1} parent=35 // pred_fallthru
          _
      $region36: #{tpu_custom_call.1} parent=5 // pred_fallthru
        _
      %p263 = scmp.le.s32.totalorder 1, %s20
      %p264 = scmp.lt.s32.totalorder %s20, 3
      %p265 = pnand %p263, %p264
      %p266 = pneg %p265
      // Predicated region
      $region41: #{tpu_custom_call.1} parent=5 // pred_check
        _
      $region42: #{tpu_custom_call.1} parent=5 // pred_check_branch
        %268 = sbr.rel (%p265) target = $region44
      $region43: #{tpu_custom_call.1} parent=5 // pred_region
        %s269 = ssub.s32 %s20, 1
        %s270 = sand.u32 %s33, 1
        %s271 = scalar_lea.sflag [#allocation3], %s270
        %s272 = sand.u32 %s33, 1
        %s273 = smul.addr %s272, 256
        %s274 = scalar_lea.vmem [#allocation2], %s273
        // Predicated region
        $region45: #{tpu_custom_call.1} parent=43 // pred_check
          %p275 = pneg %p46
        $region46: #{tpu_custom_call.1} parent=43 // pred_check_branch
          %277 = sbr.rel (%p275) target = $region48
        $region47: #{tpu_custom_call.1} parent=43 // pred_region
          %278 = dma.done %s271, 4096
        $region48: #{tpu_custom_call.1} parent=43 // pred_fallthru
          _
        // Predicated region
        $region49: #{tpu_custom_call.1} parent=43 // pred_check
          %p279 = pneg %p67
        $region50: #{tpu_custom_call.1} parent=43 // pred_check_branch
          %281 = sbr.rel (%p279) target = $region52
        $region51: #{tpu_custom_call.1} parent=43 // pred_region
          %282 = dma.done [#allocation6], 512
        $region52: #{tpu_custom_call.1} parent=43 // pred_fallthru
          _
        // Predicated region
        $region53: #{tpu_custom_call.1} parent=43 // pred_check
          %p283 = pneg %p88
        $region54: #{tpu_custom_call.1} parent=43 // pred_check_branch
          %285 = sbr.rel (%p283) target = $region56
        $region55: #{tpu_custom_call.1} parent=43 // pred_region
          %286 = dma.done [#allocation6], 256
        $region56: #{tpu_custom_call.1} parent=43 // pred_fallthru
          _
        // Predicated region
        $region57: #{tpu_custom_call.1} parent=43 // pred_check
          %p287 = pneg %p130
        $region58: #{tpu_custom_call.1} parent=43 // pred_check_branch
          %289 = sbr.rel (%p287) target = $region60
        $region59: #{tpu_custom_call.1} parent=43 // pred_region
          %290 = dma.done [#allocation9], 2048
        $region60: #{tpu_custom_call.1} parent=43 // pred_fallthru
          _
        %s291 = sand.u32 %s33, 1
        %s292 = scalar_lea.sflag [#allocation3], %s291
        %s293 = sand.u32 %s33, 1
        %s294 = smul.addr %s293, 256
        %s295 = scalar_lea.vmem [#allocation2], %s294
        %p296 = pneg %p46
        %p297 = pneg %p43
        %p298 = pneg %p67
        %p299 = pneg %p64
        %p300 = pneg %p88
        %p301 = pneg %p85
        %p302 = pneg %p109
        %p303 = pneg %p106
        %p304 = pneg %p130
        %p305 = pneg %p127
        %p306 = pneg %p151
        %p307 = pneg %p148
        %p308 = pneg %p177
        %p309 = pneg %p174
        %s310 = sand.u32 %s164, 1
        %s311 = scalar_lea.sflag [#allocation4], %s310
        %s312 = sand.u32 %s164, 1
        %s313 = smul.addr %s312, 8
        %s314 = scalar_lea.vmem [#allocation10], %s313
        %s315 = smul.u32 8, %s25
        %v316 = vld [vmem:[%s274] sm:$0xff]
        %v317 = vld [vmem:[%s274 + $0x8] sm:$0xff]
        %v318 = vld [vmem:[%s274 + $0x10] sm:$0xff]
        %v319 = vld [vmem:[%s274 + $0x18] sm:$0xff]
        %v320 = vld [vmem:[%s274 + $0x20] sm:$0xff]
        %v321 = vld [vmem:[%s274 + $0x28] sm:$0xff]
        %v322 = vld [vmem:[%s274 + $0x30] sm:$0xff]
        %v323 = vld [vmem:[%s274 + $0x38] sm:$0xff]
        %v324 = vld [vmem:[%s274 + $0x40] sm:$0xff]
        %v325 = vld [vmem:[%s274 + $0x48] sm:$0xff]
        %v326 = vld [vmem:[%s274 + $0x50] sm:$0xff]
        %v327 = vld [vmem:[%s274 + $0x58] sm:$0xff]
        %v328 = vld [vmem:[%s274 + $0x60] sm:$0xff]
        %v329 = vld [vmem:[%s274 + $0x68] sm:$0xff]
        %v330 = vld [vmem:[%s274 + $0x70] sm:$0xff]
        %v331 = vld [vmem:[%s274 + $0x78] sm:$0xff]
        %v332 = vld [vmem:[%s274 + $0x80] sm:$0xff]
        %v333 = vld [vmem:[%s274 + $0x88] sm:$0xff]
        %v334 = vld [vmem:[%s274 + $0x90] sm:$0xff]
        %v335 = vld [vmem:[%s274 + $0x98] sm:$0xff]
        %v336 = vld [vmem:[%s274 + $0xa0] sm:$0xff]
        %v337 = vld [vmem:[%s274 + $0xa8] sm:$0xff]
        %v338 = vld [vmem:[%s274 + $0xb0] sm:$0xff]
        %v339 = vld [vmem:[%s274 + $0xb8] sm:$0xff]
        %v340 = vld [vmem:[%s274 + $0xc0] sm:$0xff]
        %v341 = vld [vmem:[%s274 + $0xc8] sm:$0xff]
        %v342 = vld [vmem:[%s274 + $0xd0] sm:$0xff]
        %v343 = vld [vmem:[%s274 + $0xd8] sm:$0xff]
        %v344 = vld [vmem:[%s274 + $0xe0] sm:$0xff]
        %v345 = vld [vmem:[%s274 + $0xe8] sm:$0xff]
        %v346 = vld [vmem:[%s274 + $0xf0] sm:$0xff]
        %v347 = vld [vmem:[%s274 + $0xf8] sm:$0xff]
        %v348 = vld [vmem:[#allocation5] sm:$0xff]
        %v349 = vld [vmem:[#allocation5 + $0x8] sm:$0xff]
        %v350 = vld [vmem:[#allocation5 + $0x10] sm:$0xff]
        %v351 = vld [vmem:[#allocation5 + $0x18] sm:$0xff]
        %v352 = vmul.f32 %v316, %v348
        %v353 = vmul.f32 %v317, %v349
        %v354 = vmul.f32 %v318, %v350
        %v355 = vmul.f32 %v319, %v351
        %v356 = vmul.f32 %v320, %v348
        %v357 = vmul.f32 %v321, %v349
        %v358 = vmul.f32 %v322, %v350
        %v359 = vmul.f32 %v323, %v351
        %v360 = vmul.f32 %v324, %v348
        %v361 = vmul.f32 %v325, %v349
        %v362 = vmul.f32 %v326, %v350
        %v363 = vmul.f32 %v327, %v351
        %v364 = vmul.f32 %v328, %v348
        %v365 = vmul.f32 %v329, %v349
        %v366 = vmul.f32 %v330, %v350
        %v367 = vmul.f32 %v331, %v351
        %v368 = vmul.f32 %v332, %v348
        %v369 = vmul.f32 %v333, %v349
        %v370 = vmul.f32 %v334, %v350
        %v371 = vmul.f32 %v335, %v351
        %v372 = vmul.f32 %v336, %v348
        %v373 = vmul.f32 %v337, %v349
        %v374 = vmul.f32 %v338, %v350
        %v375 = vmul.f32 %v339, %v351
        %v376 = vmul.f32 %v340, %v348
        %v377 = vmul.f32 %v341, %v349
        %v378 = vmul.f32 %v342, %v350
        %v379 = vmul.f32 %v343, %v351
        %v380 = vmul.f32 %v344, %v348
        %v381 = vmul.f32 %v345, %v349
        %v382 = vmul.f32 %v346, %v350
        %v383 = vmul.f32 %v347, %v351
        %v384 = vadd.f32 %v352, %v353
        %385 = vadd.xlane.f32.xlu0 %v384
        %v386 = vpop.xlane.xlu0 %385
        %v387 = vadd.f32 %v354, %v355
        %388 = vadd.xlane.f32.xlu0 %v387
        %v389 = vpop.xlane.xlu0 %388
        %v390 = vadd.f32 %v356, %v357
        %391 = vadd.xlane.f32.xlu0 %v390
        %v392 = vpop.xlane.xlu0 %391
        %v393 = vadd.f32 %v358, %v359
        %394 = vadd.xlane.f32.xlu0 %v393
        %v395 = vpop.xlane.xlu0 %394
        %v396 = vadd.f32 %v360, %v361
        %397 = vadd.xlane.f32.xlu0 %v396
        %v398 = vpop.xlane.xlu0 %397
        %v399 = vadd.f32 %v362, %v363
        %400 = vadd.xlane.f32.xlu0 %v399
        %v401 = vpop.xlane.xlu0 %400
        %v402 = vadd.f32 %v364, %v365
        %403 = vadd.xlane.f32.xlu0 %v402
        %v404 = vpop.xlane.xlu0 %403
        %v405 = vadd.f32 %v366, %v367
        %406 = vadd.xlane.f32.xlu0 %v405
        %v407 = vpop.xlane.xlu0 %406
        %v408 = vadd.f32 %v368, %v369
        %409 = vadd.xlane.f32.xlu0 %v408
        %v410 = vpop.xlane.xlu0 %409
        %v411 = vadd.f32 %v370, %v371
        %412 = vadd.xlane.f32.xlu0 %v411
        %v413 = vpop.xlane.xlu0 %412
        %v414 = vadd.f32 %v372, %v373
        %415 = vadd.xlane.f32.xlu0 %v414
        %v416 = vpop.xlane.xlu0 %415
        %v417 = vadd.f32 %v374, %v375
        %418 = vadd.xlane.f32.xlu0 %v417
        %v419 = vpop.xlane.xlu0 %418
        %v420 = vadd.f32 %v376, %v377
        %421 = vadd.xlane.f32.xlu0 %v420
        %v422 = vpop.xlane.xlu0 %421
        %v423 = vadd.f32 %v378, %v379
        %424 = vadd.xlane.f32.xlu0 %v423
        %v425 = vpop.xlane.xlu0 %424
        %v426 = vadd.f32 %v380, %v381
        %427 = vadd.xlane.f32.xlu0 %v426
        %v428 = vpop.xlane.xlu0 %427
        %v429 = vadd.f32 %v382, %v383
        %430 = vadd.xlane.f32.xlu0 %v429
        %v431 = vpop.xlane.xlu0 %430
        %v432 = vld [vmem:[#allocation7] sm:$0xff]
        %v433 = vld [vmem:[#allocation7 + $0x8] sm:$0xff]
        %v434 = vld [vmem:[%s3] sm:$0x1]
        %v436 = vlaneseq
        %v437 = vshrl.u32 %v436, 7
        %v438 = vsub.s32 0, %v437
        %v439 = vrot.slane %v434, %v438
        %v457 = vlaneseq
        %v458 = vand.u32 %v457, 127
        %v459 = vlaneseq
        %v460 = vshrl.u32 %v459, 7
        %v461 = vsub.s32 %v458, %v460
        %v462 = vrot.slane %v386, %v461
        %v463 = vadd.s32 %v458, 4294967288
        %v464 = vlaneseq
        %v465 = vshrl.u32 %v464, 7
        %v466 = vsub.s32 %v463, %v465
        %v467 = vrot.slane %v389, %v466
        %vm468 = vcmask 130112
        %v469 = vsel %vm468, %v467, %v462
        %v470 = vlaneseq
        %v471 = vshrl.u32 %v470, 7
        %v472 = vsub.s32 %v458, %v471
        %v473 = vrot.slane %v392, %v472
        %v474 = vlaneseq
        %v475 = vshrl.u32 %v474, 7
        %v476 = vsub.s32 %v463, %v475
        %v477 = vrot.slane %v395, %v476
        %v478 = vsel %vm468, %v477, %v473
        %v479 = vlaneseq
        %v480 = vshrl.u32 %v479, 7
        %v481 = vsub.s32 %v458, %v480
        %v482 = vrot.slane %v398, %v481
        %v483 = vlaneseq
        %v484 = vshrl.u32 %v483, 7
        %v485 = vsub.s32 %v463, %v484
        %v486 = vrot.slane %v401, %v485
        %v487 = vsel %vm468, %v486, %v482
        %v488 = vlaneseq
        %v489 = vshrl.u32 %v488, 7
        %v490 = vsub.s32 %v458, %v489
        %v491 = vrot.slane %v404, %v490
        %v492 = vlaneseq
        %v493 = vshrl.u32 %v492, 7
        %v494 = vsub.s32 %v463, %v493
        %v495 = vrot.slane %v407, %v494
        %v496 = vsel %vm468, %v495, %v491
        %v497 = vlaneseq
        %v498 = vshrl.u32 %v497, 7
        %v499 = vsub.s32 %v458, %v498
        %v500 = vrot.slane %v410, %v499
        %v501 = vlaneseq
        %v502 = vshrl.u32 %v501, 7
        %v503 = vsub.s32 %v463, %v502
        %v504 = vrot.slane %v413, %v503
        %v505 = vsel %vm468, %v504, %v500
        %v506 = vlaneseq
        %v507 = vshrl.u32 %v506, 7
        %v508 = vsub.s32 %v458, %v507
        %v509 = vrot.slane %v416, %v508
        %v510 = vlaneseq
        %v511 = vshrl.u32 %v510, 7
        %v512 = vsub.s32 %v463, %v511
        %v513 = vrot.slane %v419, %v512
        %v514 = vsel %vm468, %v513, %v509
        %v515 = vlaneseq
        %v516 = vshrl.u32 %v515, 7
        %v517 = vsub.s32 %v458, %v516
        %v518 = vrot.slane %v422, %v517
        %v519 = vlaneseq
        %v520 = vshrl.u32 %v519, 7
        %v521 = vsub.s32 %v463, %v520
        %v522 = vrot.slane %v425, %v521
        %v523 = vsel %vm468, %v522, %v518
        %v524 = vlaneseq
        %v525 = vshrl.u32 %v524, 7
        %v526 = vsub.s32 %v458, %v525
        %v527 = vrot.slane %v428, %v526
        %v528 = vlaneseq
        %v529 = vshrl.u32 %v528, 7
        %v530 = vsub.s32 %v463, %v529
        %v531 = vrot.slane %v431, %v530
        %v532 = vsel %vm468, %v531, %v527
        %vm533 = vcmask 1041409
        %v534 = vsel %vm533, %v478, %v469
        %vm535 = vcmask 1042434
        %v536 = vsel %vm535, %v487, %v534
        %vm537 = vcmask 1043459
        %v538 = vsel %vm537, %v496, %v536
        %vm539 = vcmask 1044484
        %v540 = vsel %vm539, %v505, %v538
        %vm541 = vcmask 1045509
        %v542 = vsel %vm541, %v514, %v540
        %vm543 = vcmask 1046534
        %v544 = vsel %vm543, %v523, %v542
        %vm545 = vcmask 1047559
        %v546 = vsel %vm545, %v532, %v544
        %vm547 = vcmask 130048
        %v548 = vsel %vm547, %v546, 0
        %550 = vmatprep.subr.mxu0 0.0
        %551 = vmatpush1.msra.mxu0 %v432
        %552 = vmatprep.subr.mxu0 0.0
        %553 = vmatpush1.msra.mxu0 %v433
        %554 = vmatprep.subr.mxu0 0.0
        %555 = vmatpush1.msra.mxu0 0.0
        %556 = vmatprep.subr.mxu0 0.0
        %557 = vmatpush1.msra.mxu0 0.0
        %558 = vmatprep.subr.mxu0 0.0
        %559 = vmatpush1.msra.mxu0 0.0
        %560 = vmatprep.subr.mxu0 0.0
        %561 = vmatpush1.msra.mxu0 0.0
        %562 = vmatprep.subr.mxu0 0.0
        %563 = vmatpush1.msra.mxu0 0.0
        %564 = vmatprep.subr.mxu0 0.0
        %565 = vmatpush1.msra.mxu0 0.0
        %566 = vmatprep.subr.mxu0 0.0
        %567 = vmatpush1.msra.mxu0 0.0
        %568 = vmatprep.subr.mxu0 0.0
        %569 = vmatpush1.msra.mxu0 0.0
        %570 = vmatprep.subr.mxu0 0.0
        %571 = vmatpush1.msra.mxu0 0.0
        %572 = vmatprep.subr.mxu0 0.0
        %573 = vmatpush1.msra.mxu0 0.0
        %574 = vmatprep.subr.mxu0 0.0
        %575 = vmatpush1.msra.mxu0 0.0
        %576 = vmatprep.subr.mxu0 0.0
        %577 = vmatpush1.msra.mxu0 0.0
        %578 = vmatprep.subr.mxu0 0.0
        %579 = vmatpush1.msra.mxu0 0.0
        %580 = vmatprep.subr.mxu0 0.0
        %581 = vmatpush1.msra.mxu0 0.0
        %582 = vmatprep.subr.mxu0 0.0
        %583 = vmatpush1.msra.mxu0 0.0
        %584 = vmatprep.subr.mxu0 0.0
        %585 = vmatpush1.msra.mxu0 0.0
        %586 = vmatprep.subr.mxu0 0.0
        %587 = vmatpush1.msra.mxu0 0.0
        %588 = vmatprep.subr.mxu0 0.0
        %589 = vmatpush1.msra.mxu0 0.0
        %590 = vmatprep.subr.mxu0 0.0
        %591 = vmatpush1.msra.mxu0 0.0
        %592 = vmatprep.subr.mxu0 0.0
        %593 = vmatpush1.msra.mxu0 0.0
        %594 = vmatprep.subr.mxu0 0.0
        %595 = vmatpush1.msra.mxu0 0.0
        %596 = vmatprep.subr.mxu0 0.0
        %597 = vmatpush1.msra.mxu0 0.0
        %598 = vmatprep.subr.mxu0 0.0
        %599 = vmatpush1.msra.mxu0 0.0
        %600 = vmatprep.subr.mxu0 0.0
        %601 = vmatpush1.msra.mxu0 0.0
        %602 = vmatprep.subr.mxu0 0.0
        %603 = vmatpush1.msra.mxu0 0.0
        %604 = vmatprep.subr.mxu0 0.0
        %605 = vmatpush1.msra.mxu0 0.0
        %606 = vmatprep.subr.mxu0 0.0
        %607 = vmatpush1.msra.mxu0 0.0
        %608 = vmatprep.subr.mxu0 0.0
        %609 = vmatpush1.msra.mxu0 0.0
        %610 = vmatprep.subr.mxu0 0.0
        %611 = vmatpush1.msra.mxu0 0.0
        %612 = vmatprep.subr.mxu0 0.0
        %613 = vmatpush1.msra.mxu0 0.0
        %614 = vmatprep.mubr.f32.mxu0 0.0
        %615 = vmatmul.mubr.f32.gmra.mrb[0].mxu0 %v548
        %v616 = vpop.f32.mrb[0].mxu0
        %v617 = vadd.f32 %v439, %v616
        %v618 = vpop.f32.mrb[0].mxu0
        %619 = vdwg.mxu0
        %v620 = vmul.f32 %v617, 0.1
        %v621 = vmax.f32 %v617, %v620
        %v622 = vld [vmem:[#allocation8] sm:$0xff]
        %v623 = vld [vmem:[#allocation8 + $0x8] sm:$0xff]
        %v624 = vld [vmem:[#allocation8 + $0x10] sm:$0xff]
        %v625 = vld [vmem:[#allocation8 + $0x18] sm:$0xff]
        %v626 = vld [vmem:[#allocation8 + $0x20] sm:$0xff]
        %v627 = vld [vmem:[#allocation8 + $0x28] sm:$0xff]
        %v628 = vld [vmem:[#allocation8 + $0x30] sm:$0xff]
        %v629 = vld [vmem:[#allocation8 + $0x38] sm:$0xff]
        %v630 = vld [vmem:[#allocation8 + $0x40] sm:$0xff]
        %v631 = vld [vmem:[#allocation8 + $0x48] sm:$0xff]
        %v632 = vld [vmem:[#allocation8 + $0x50] sm:$0xff]
        %v633 = vld [vmem:[#allocation8 + $0x58] sm:$0xff]
        %v634 = vld [vmem:[#allocation8 + $0x60] sm:$0xff]
        %v635 = vld [vmem:[#allocation8 + $0x68] sm:$0xff]
        %v636 = vld [vmem:[#allocation8 + $0x70] sm:$0xff]
        %v637 = vld [vmem:[#allocation8 + $0x78] sm:$0xff]
        %v638 = vld [vmem:[%s5] sm:$0x1]
        %v640 = vlaneseq
        %v641 = vshrl.u32 %v640, 7
        %v642 = vsub.s32 0, %v641
        %v643 = vrot.slane %v638, %v642
        %645 = vmatprep.subr.mxu0 0.0
        %646 = vmatpush1.msra.mxu0 %v622
        %647 = vmatprep.subr.mxu0 0.0
        %648 = vmatpush1.msra.mxu0 %v623
        %649 = vmatprep.subr.mxu0 0.0
        %650 = vmatpush1.msra.mxu0 %v624
        %651 = vmatprep.subr.mxu0 0.0
        %652 = vmatpush1.msra.mxu0 %v625
        %653 = vmatprep.subr.mxu0 0.0
        %654 = vmatpush1.msra.mxu0 %v626
        %655 = vmatprep.subr.mxu0 0.0
        %656 = vmatpush1.msra.mxu0 %v627
        %657 = vmatprep.subr.mxu0 0.0
        %658 = vmatpush1.msra.mxu0 %v628
        %659 = vmatprep.subr.mxu0 0.0
        %660 = vmatpush1.msra.mxu0 %v629
        %661 = vmatprep.subr.mxu0 0.0
        %662 = vmatpush1.msra.mxu0 %v630
        %663 = vmatprep.subr.mxu0 0.0
        %664 = vmatpush1.msra.mxu0 %v631
        %665 = vmatprep.subr.mxu0 0.0
        %666 = vmatpush1.msra.mxu0 %v632
        %667 = vmatprep.subr.mxu0 0.0
        %668 = vmatpush1.msra.mxu0 %v633
        %669 = vmatprep.subr.mxu0 0.0
        %670 = vmatpush1.msra.mxu0 %v634
        %671 = vmatprep.subr.mxu0 0.0
        %672 = vmatpush1.msra.mxu0 %v635
        %673 = vmatprep.subr.mxu0 0.0
        %674 = vmatpush1.msra.mxu0 %v636
        %675 = vmatprep.subr.mxu0 0.0
        %676 = vmatpush1.msra.mxu0 %v637
        %677 = vmatprep.subr.mxu0 0.0
        %678 = vmatpush1.msra.mxu0 0.0
        %679 = vmatprep.subr.mxu0 0.0
        %680 = vmatpush1.msra.mxu0 0.0
        %681 = vmatprep.subr.mxu0 0.0
        %682 = vmatpush1.msra.mxu0 0.0
        %683 = vmatprep.subr.mxu0 0.0
        %684 = vmatpush1.msra.mxu0 0.0
        %685 = vmatprep.subr.mxu0 0.0
        %686 = vmatpush1.msra.mxu0 0.0
        %687 = vmatprep.subr.mxu0 0.0
        %688 = vmatpush1.msra.mxu0 0.0
        %689 = vmatprep.subr.mxu0 0.0
        %690 = vmatpush1.msra.mxu0 0.0
        %691 = vmatprep.subr.mxu0 0.0
        %692 = vmatpush1.msra.mxu0 0.0
        %693 = vmatprep.subr.mxu0 0.0
        %694 = vmatpush1.msra.mxu0 0.0
        %695 = vmatprep.subr.mxu0 0.0
        %696 = vmatpush1.msra.mxu0 0.0
        %697 = vmatprep.subr.mxu0 0.0
        %698 = vmatpush1.msra.mxu0 0.0
        %699 = vmatprep.subr.mxu0 0.0
        %700 = vmatpush1.msra.mxu0 0.0
        %701 = vmatprep.subr.mxu0 0.0
        %702 = vmatpush1.msra.mxu0 0.0
        %703 = vmatprep.subr.mxu0 0.0
        %704 = vmatpush1.msra.mxu0 0.0
        %705 = vmatprep.subr.mxu0 0.0
        %706 = vmatpush1.msra.mxu0 0.0
        %707 = vmatprep.subr.mxu0 0.0
        %708 = vmatpush1.msra.mxu0 0.0
        %709 = vmatprep.mubr.f32.mxu0 0.0
        %710 = vmatmul.mubr.f32.gmra.mrb[0].mxu0 %v621
        %v711 = vpop.f32.mrb[0].mxu0
        %v712 = vadd.f32 %v643, %v711
        %v713 = vpop.f32.mrb[0].mxu0
        %714 = vdwg.mxu0
        %v715 = vsub.f32 0.0, %v712
        %v716 = vmul.f32 %v715, 1.442695
        %v717 = vpow.pop %v716
        %v718 = vadd.f32 %v717, 1.0
        %v719 = vrcp.pop %v718
        %720 = vst [vmem:[%s314] sm:$0xff] %v719
        %s721 = sand.u32 %s164, 1
        %s722 = scalar_lea.sflag [#allocation4], %s721
        %s723 = sand.u32 %s164, 1
        %s724 = smul.addr %s723, 8
        %s725 = scalar_lea.vmem [#allocation10], %s724
        // Predicated region
        $region61: #{tpu_custom_call.1} parent=43 // pred_check
          %p726 = pneg %p174
        $region62: #{tpu_custom_call.1} parent=43 // pred_check_branch
          %728 = sbr.rel (%p726) target = $region64
        $region63: #{tpu_custom_call.1} parent=43 // pred_region
          %s730 = ssub.s32 128, 128
          %731 = vsyncadd %s722, %s730
          %s732 = smul.addr %s25, 128
          %s733 = scalar_lea.hbm %s6, %s732
          %s735 = sshll.u32 %s725, 4
          %s736 = int_to_ptr.vmem [resolvable:$true] %s735
          %738 = dma.vmem_to_hbm [thread:$0]  %s736, 128, %s733, %s722
        $region64: #{tpu_custom_call.1} parent=43 // pred_fallthru
          _
      $region44: #{tpu_custom_call.1} parent=5 // pred_fallthru
        _
      %p739 = scmp.le.s32.totalorder 2, %s20
      // Predicated region
      $region65: #{tpu_custom_call.1} parent=5 // pred_check
        %p740 = pneg %p739
      $region66: #{tpu_custom_call.1} parent=5 // pred_check_branch
        %742 = sbr.rel (%p740) target = $region68
      $region67: #{tpu_custom_call.1} parent=5 // pred_region
        %s743 = ssub.s32 %s20, 2
        // Predicated region
        $region69: #{tpu_custom_call.1} parent=67 // pred_check
          %p744 = pneg %p180
        $region70: #{tpu_custom_call.1} parent=67 // pred_check_branch
          %746 = sbr.rel (%p744) target = $region72
        $region71: #{tpu_custom_call.1} parent=67 // pred_region
          %s747 = sand.u32 %s165, 1
          %s748 = scalar_lea.sflag [#allocation4], %s747
          %s749 = sand.u32 %s165, 1
          %s750 = smul.addr %s749, 8
          %s751 = scalar_lea.vmem [#allocation10], %s750
          %752 = dma.done %s748, 128
        $region72: #{tpu_custom_call.1} parent=67 // pred_fallthru
          _
      $region68: #{tpu_custom_call.1} parent=5 // pred_fallthru
        _
    $region6: #{tpu_custom_call.1} parent=1 // loop_footer
      %s24 = sadd.s32 1, %s20
    $region7: #{tpu_custom_call.1} parent=1 // loop_footer_branch
      %19 = sbr.rel target = $region3
    $region8: #{tpu_custom_call.1} parent=1 // loop_exit
      _
    %753 = vsyncpa [#allocation3], 1
    %s754 = scalar_lea.sflag [#allocation3], 1
    %755 = vsyncpa %s754, 1
    %756 = vsyncpa [#allocation6], 1
    %757 = vsyncpa [#allocation9], 1
    %758 = vsyncpa [#allocation4], 1
    %s759 = scalar_lea.sflag [#allocation4], 1
    %760 = vsyncpa %s759, 1

</llo_original>
